<compile_context>
chip_gen: v7x
topology: tpu7x:2x2x1
jax: 0.10.0
libtpu: 0.0.40
codegen_flags: <defaults>
</compile_context>

<pallas_src>
import functools

import jax
import jax.numpy as jnp
from jax.experimental import pallas as pl
from jax.experimental.pallas import tpu as pltpu

_SUBLANE = 8


def _round_up(x: int, m: int) -> int:
    return (x + m - 1) // m * m


def encoder_kernel(x_ref, w1_ref, b1_ref, w2_ref, b2_ref, ss_ref, o_ref):
    # x_ref:  (TB, D_in)   VMEM   batch tile, true lane width
    # w1_ref: (D_in, H)    VMEM   resident across grid
    # b1_ref: (1, H)       VMEM
    # w2_ref: (H, D_out)   VMEM   resident across grid
    # b2_ref: (1, D_out)   VMEM
    # ss_ref: (1, 2)       SMEM   [scale, shift]
    # o_ref:  (TB, D_out)  VMEM   output tile in consumer dtype
    x = x_ref[...].astype(jnp.float32)
    h = jnp.dot(x, w1_ref[...],
                preferred_element_type=jnp.float32,
                precision=jax.lax.Precision.HIGHEST) + b1_ref[...]
    scale = ss_ref[0, 0]
    shift = ss_ref[0, 1]
    a = jax.nn.sigmoid(h) * scale + shift
    out = jnp.dot(a, w2_ref[...],
                  preferred_element_type=jnp.float32,
                  precision=jax.lax.Precision.HIGHEST) + b2_ref[...]
    o_ref[...] = out.astype(o_ref.dtype)


def prepare_encoder_params(w1, b1, w2, b2):
    """Call-once prep: transpose PyTorch (out,in) weights to (in,out) and make
    biases 2-D.  No lane padding - full-dim blocks are legal and keep HBM
    traffic at true size."""
    h, d_in = w1.shape
    d_out = w2.shape[0]
    w1_t = jnp.transpose(w1).astype(jnp.float32)   # (d_in, h)
    b1_r = b1.reshape(1, h).astype(jnp.float32)
    w2_t = jnp.transpose(w2).astype(jnp.float32)   # (h, d_out)
    b2_r = b2.reshape(1, d_out).astype(jnp.float32)
    return w1_t, b1_r, w2_t, b2_r


@functools.partial(jax.jit, static_argnames=("block_b",))
def encoder_forward_prepared(x, w1_t, b1_r, w2_t, b2_r, scale, shift, *,
                             block_b=512):
    """x: (B, D_in).  w*_t / b*_r from prepare_encoder_params.  scale/shift: (1,)."""
    B, d_in = x.shape
    d_in_w, h = w1_t.shape
    d_out = w2_t.shape[1]
    assert d_in_w == d_in

    # Batch tile: multiple of 8 sublanes; keep >=2 grid steps when the batch
    # spans more than one sublane tile so both v7x TensorCores get work.
    tb = _round_up(min(block_b, B), _SUBLANE)
    if B > _SUBLANE:
        tb = min(tb, _round_up(-(-B // 2), _SUBLANE))
    tb = max(tb, _SUBLANE)

    b_p = _round_up(B, tb)
    grid = (b_p // tb,)

    # Pad batch remainder only (no lane padding, no pad at all when tb | B).
    x_in = x if b_p == B else jnp.pad(x, ((0, b_p - B), (0, 0)))

    ss = jnp.concatenate(
        [jnp.reshape(scale, (-1,))[:1], jnp.reshape(shift, (-1,))[:1]]
    ).reshape(1, 2).astype(jnp.float32)

    out_dtype = x.dtype
    flops = 2 * b_p * (d_in * h + h * d_out)
    bytes_accessed = (x_in.dtype.itemsize * b_p * d_in
                      + 4 * (d_in * h + h + h * d_out + d_out)
                      + jnp.dtype(out_dtype).itemsize * b_p * d_out)

    out = pl.pallas_call(
        encoder_kernel,
        out_shape=jax.ShapeDtypeStruct((b_p, d_out), out_dtype),
        grid=grid,
        in_specs=[
            pl.BlockSpec((tb, d_in), lambda i: (i, 0)),    # x tile (true lanes)
            pl.BlockSpec((d_in, h), lambda i: (0, 0)),     # w1 (resident)
            pl.BlockSpec((1, h), lambda i: (0, 0)),        # b1
            pl.BlockSpec((h, d_out), lambda i: (0, 0)),    # w2 (resident)
            pl.BlockSpec((1, d_out), lambda i: (0, 0)),    # b2
            pl.BlockSpec(memory_space=pltpu.SMEM),         # [scale, shift]
        ],
        out_specs=pl.BlockSpec((tb, d_out), lambda i: (i, 0)),
        compiler_params=pltpu.CompilerParams(
            dimension_semantics=("parallel",),
            vmem_limit_bytes=32 * 1024 * 1024),
        cost_estimate=pl.CostEstimate(
            flops=flops,
            transcendentals=b_p * h,
            bytes_accessed=bytes_accessed),
    )(x_in, w1_t, b1_r, w2_t, b2_r, ss)

    return out if b_p == B else out[:B]


def encoder_forward(x, w1, b1, w2, b2, scale, shift, block_b=512):
    """Convenience wrapper (prep + call).  For repeated calls with fixed
    weights, call prepare_encoder_params once and reuse the result."""
    params = prepare_encoder_params(w1, b1, w2, b2)
    return encoder_forward_prepared(x, *params, scale, shift, block_b=block_b)


def encoder_reference(x, w1, b1, w2, b2, scale, shift):
    h = jnp.dot(x, w1.T, precision=jax.lax.Precision.HIGHEST) + b1
    a = jax.nn.sigmoid(h) * scale + shift
    return jnp.dot(a, w2.T, precision=jax.lax.Precision.HIGHEST) + b2


if __name__ == "__main__":
    # Shapes consistent with the module (hidden_dim = 64).
    B, D_in, H, D_out = 8, 32, 64, 16

    key = jax.random.PRNGKey(0)
    k_x, k_w1, k_b1, k_w2, k_b2, k_x2 = jax.random.split(key, 6)

    x = jax.random.normal(k_x, (B, D_in), dtype=jnp.float32)

    # Deterministic parameter init (PyTorch-Linear-style uniform bounds).
    lim1 = 1.0 / jnp.sqrt(D_in)
    lim2 = 1.0 / jnp.sqrt(H)
    w1 = jax.random.uniform(k_w1, (H, D_in), minval=-lim1, maxval=lim1, dtype=jnp.float32)
    b1 = jax.random.uniform(k_b1, (H,), minval=-lim1, maxval=lim1, dtype=jnp.float32)
    w2 = jax.random.uniform(k_w2, (D_out, H), minval=-lim2, maxval=lim2, dtype=jnp.float32)
    b2 = jax.random.uniform(k_b2, (D_out,), minval=-lim2, maxval=lim2, dtype=jnp.float32)
    scale = jnp.ones((1,), dtype=jnp.float32)   # nn.Parameter(torch.ones(1))
    shift = jnp.zeros((1,), dtype=jnp.float32)  # nn.Parameter(torch.zeros(1))

    # --- test 1: default init, single grid step ---
    out = encoder_forward(x, w1, b1, w2, b2, scale, shift)
    out = jax.block_until_ready(out)
    ref = encoder_reference(x, w1, b1, w2, b2, scale, shift)
    assert out.shape == (B, D_out)
    assert out.dtype == x.dtype
    assert jnp.allclose(out, ref, atol=1e-5, rtol=1e-5), "mismatch vs reference (test 1)"

    # --- test 2: ragged batch + multiple grid steps + non-trivial scale/shift ---
    B2 = 40
    x2 = jax.random.normal(k_x2, (B2, D_in), dtype=jnp.float32)
    scale2 = jnp.full((1,), 1.3, dtype=jnp.float32)
    shift2 = jnp.full((1,), -0.2, dtype=jnp.float32)
    params = prepare_encoder_params(w1, b1, w2, b2)
    out2 = encoder_forward_prepared(x2, *params, scale2, shift2, block_b=16)
    out2 = jax.block_until_ready(out2)
    ref2 = encoder_reference(x2, w1, b1, w2, b2, scale2, shift2)
    assert out2.shape == (B2, D_out)
    assert jnp.allclose(out2, ref2, atol=1e-5, rtol=1e-5), "mismatch vs reference (test 2)"

    print("KERNEL_OK")
</pallas_src>

<mosaic_0001>
module attributes {stable_mosaic.version = 11 : i64} {
  func.func @encoder_kernel(%arg0: i32, %arg1: memref<8x32xf32, #tpu.memory_space<vmem>>, %arg2: memref<32x64xf32, #tpu.memory_space<vmem>>, %arg3: memref<1x64xf32, #tpu.memory_space<vmem>>, %arg4: memref<64x16xf32, #tpu.memory_space<vmem>>, %arg5: memref<1x16xf32, #tpu.memory_space<vmem>>, %arg6: memref<1x2xf32, #tpu.memory_space<smem>>, %arg7: memref<8x16xf32, #tpu.memory_space<vmem>>) attributes {dimension_semantics = [#tpu.dimension_semantics<parallel>], iteration_bounds = array<i64: 1>, scalar_prefetch = 0 : i64, scratch_operands = 0 : i64, tpu.core_type = #tpu.core_type<tc>, window_params = [{transform_indices = @transform_0, window_bounds = array<i64: 8, 32>}, {pipeline_mode = #tpu.pipeline_mode<synchronous>, transform_indices = @transform_1, window_bounds = array<i64: 32, 64>}, {pipeline_mode = #tpu.pipeline_mode<synchronous>, transform_indices = @transform_2, window_bounds = array<i64: 1, 64>}, {pipeline_mode = #tpu.pipeline_mode<synchronous>, transform_indices = @transform_3, window_bounds = array<i64: 64, 16>}, {pipeline_mode = #tpu.pipeline_mode<synchronous>, transform_indices = @transform_4, window_bounds = array<i64: 1, 16>}, {transform_indices = @transform_5, window_bounds = array<i64: 1, 2>}, {transform_indices = @transform_6, window_bounds = array<i64: 8, 16>}]} {
    %c0 = arith.constant 0 : index
    %c0_0 = arith.constant 0 : index
    %0 = vector.load %arg1[%c0, %c0_0] : memref<8x32xf32, #tpu.memory_space<vmem>>, vector<8x32xf32>
    %c0_1 = arith.constant 0 : index
    %c0_2 = arith.constant 0 : index
    %1 = vector.load %arg2[%c0_1, %c0_2] : memref<32x64xf32, #tpu.memory_space<vmem>>, vector<32x64xf32>
    %cst = arith.constant dense<0.000000e+00> : vector<8x64xf32>
    %2 = tpu.matmul %0, %1, %cst {dimension_numbers = #tpu.dot_dimension_numbers<[1], [0], [0], [1], [0, 0, 1, 1], [], []>, precision = #tpu.contract_precision<fp32>} : vector<8x32xf32>, vector<32x64xf32>, vector<8x64xf32> -> vector<8x64xf32>
    %c0_3 = arith.constant 0 : index
    %c0_4 = arith.constant 0 : index
    %3 = vector.load %arg3[%c0_3, %c0_4] : memref<1x64xf32, #tpu.memory_space<vmem>>, vector<1x64xf32>
    %4 = vector.broadcast %3 : vector<1x64xf32> to vector<8x64xf32>
    %5 = arith.addf %2, %4 : vector<8x64xf32>
    %c0_5 = arith.constant 0 : index
    %c0_6 = arith.constant 0 : index
    %6 = memref.load %arg6[%c0_5, %c0_6] : memref<1x2xf32, #tpu.memory_space<smem>>
    %c0_7 = arith.constant 0 : index
    %c1 = arith.constant 1 : index
    %7 = memref.load %arg6[%c0_7, %c1] : memref<1x2xf32, #tpu.memory_space<smem>>
    %8 = arith.negf %5 : vector<8x64xf32>
    %9 = math.exp %8 : vector<8x64xf32>
    %cst_8 = arith.constant 1.000000e+00 : f32
    %10 = vector.broadcast %cst_8 : f32 to vector<8x64xf32>
    %11 = arith.addf %10, %9 : vector<8x64xf32>
    %12 = arith.divf %10, %11 : vector<8x64xf32>
    %13 = vector.broadcast %6 : f32 to vector<8x64xf32>
    %14 = arith.mulf %12, %13 : vector<8x64xf32>
    %15 = vector.broadcast %7 : f32 to vector<8x64xf32>
    %16 = arith.addf %14, %15 : vector<8x64xf32>
    %c0_9 = arith.constant 0 : index
    %c0_10 = arith.constant 0 : index
    %17 = vector.load %arg4[%c0_9, %c0_10] : memref<64x16xf32, #tpu.memory_space<vmem>>, vector<64x16xf32>
    %cst_11 = arith.constant dense<0.000000e+00> : vector<8x16xf32>
    %18 = tpu.matmul %16, %17, %cst_11 {dimension_numbers = #tpu.dot_dimension_numbers<[1], [0], [0], [1], [0, 0, 1, 1], [], []>, precision = #tpu.contract_precision<fp32>} : vector<8x64xf32>, vector<64x16xf32>, vector<8x16xf32> -> vector<8x16xf32>
    %c0_12 = arith.constant 0 : index
    %c0_13 = arith.constant 0 : index
    %19 = vector.load %arg5[%c0_12, %c0_13] : memref<1x16xf32, #tpu.memory_space<vmem>>, vector<1x16xf32>
    %20 = vector.broadcast %19 : vector<1x16xf32> to vector<8x16xf32>
    %21 = arith.addf %18, %20 : vector<8x16xf32>
    %c0_14 = arith.constant 0 : index
    %c0_15 = arith.constant 0 : index
    %22 = vector.load %arg7[%c0_14, %c0_15] : memref<8x16xf32, #tpu.memory_space<vmem>>, vector<8x16xf32>
    tpu.vector_store %arg7[%c0_14, %c0_15], %21 {strides = array<i32>} : memref<8x16xf32, #tpu.memory_space<vmem>>, vector<8x16xf32>,
    return
  }
  func.func @transform_0(%arg0: i32) -> (i32, i32) {
    %c0_i32 = arith.constant 0 : i32
    %c0_i32_0 = arith.constant 0 : i32
    return %arg0, %c0_i32 : i32, i32
  }
  func.func @transform_1(%arg0: i32) -> (i32, i32) {
    %c0_i32 = arith.constant 0 : i32
    %c0_i32_0 = arith.constant 0 : i32
    %c0_i32_1 = arith.constant 0 : i32
    return %c0_i32, %c0_i32_0 : i32, i32
  }
  func.func @transform_2(%arg0: i32) -> (i32, i32) {
    %c0_i32 = arith.constant 0 : i32
    %c0_i32_0 = arith.constant 0 : i32
    %c0_i32_1 = arith.constant 0 : i32
    return %c0_i32, %c0_i32_0 : i32, i32
  }
  func.func @transform_3(%arg0: i32) -> (i32, i32) {
    %c0_i32 = arith.constant 0 : i32
    %c0_i32_0 = arith.constant 0 : i32
    %c0_i32_1 = arith.constant 0 : i32
    return %c0_i32, %c0_i32_0 : i32, i32
  }
  func.func @transform_4(%arg0: i32) -> (i32, i32) {
    %c0_i32 = arith.constant 0 : i32
    %c0_i32_0 = arith.constant 0 : i32
    %c0_i32_1 = arith.constant 0 : i32
    return %c0_i32, %c0_i32_0 : i32, i32
  }
  func.func @transform_5(%arg0: i32) -> (i32, i32) {
    %c0_i32 = arith.constant 0 : i32
    %c0_i32_0 = arith.constant 0 : i32
    %c0_i32_1 = arith.constant 0 : i32
    return %c0_i32, %c0_i32_0 : i32, i32
  }
  func.func @transform_6(%arg0: i32) -> (i32, i32) {
    %c0_i32 = arith.constant 0 : i32
    %c0_i32_0 = arith.constant 0 : i32
    return %arg0, %c0_i32 : i32, i32
  }
}

</mosaic_0001>

<llo_original>
// kernel: encoder_forward_prepared.1
$region0: #{encoder_forward_prepared.1}
  #allocation0 [shape = 'u32[]', space=smem, size = 0x4, offset = 0x4, fixed_abs, tag = 'smem constant byte address 0x4 - core index']
  #allocation1 [shape = 'u32[144,128]{1,0:T(1,128)}', space=vmem, size = 0x12000, scoped, tag = 'internal scratch']
  %s0 = inlined_call_operand.vmem [shape: f32[8,32], index: 0, kind: input, shape index: {}]
  %s1 = inlined_call_operand.vmem [shape: f32[32,64], index: 1, kind: input, shape index: {}]
  %s2 = inlined_call_operand.vmem [shape: f32[1,64], index: 2, kind: input, shape index: {}]
  %s3 = inlined_call_operand.vmem [shape: f32[64,16], index: 3, kind: input, shape index: {}]
  %s4 = inlined_call_operand.vmem [shape: f32[1,16], index: 4, kind: input, shape index: {}]
  %s5 = inlined_call_operand.vmem [shape: f32[1,2], index: 5, kind: input, shape index: {}]
  %s6 = inlined_call_operand.hbm [shape: f32[8,16], index: 6, kind: output, shape index: {}]
  %s7 = sld [smem:[#allocation0]]
  $region38: #{encoder_forward_prepared.1} parent=0
    _
  %s9 = ssub.s32 1, %s7
  %s10 = scalar_select 0, %s9, %s7
  $region1: #{encoder_forward_prepared.1} parent=0
    #allocation2 [shape = 'u8[512]{0}', space=smem, size = 0x200, scoped, tag = 'input window, operand 5, single buffered']
    #allocation3 [shape = 's32[1]{0}', space=sflag, size = 0x4, scoped, tag = 'scoped memory for encoder_forward_prepared.1']
    #allocation4 [shape = 's32[1]{0}', space=sflag, size = 0x4, scoped, tag = 'scoped memory for encoder_forward_prepared.1']
    #allocation5 [shape = 'u8[4096]{0}', space=vmem, size = 0x1000, scoped, tag = 'output window, operand 0, single buffered']
    %11 = vsyncpa [#allocation4], 0
    %12 = vsyncpa [#allocation3], 0
    // Predicated region
    $region2: #{encoder_forward_prepared.1} parent=1 // pred_check
      _
    $region3: #{encoder_forward_prepared.1} parent=1 // pred_check_branch
      %14 = sbr.rel (0) target = $region5
    $region4: #{encoder_forward_prepared.1} parent=1 // pred_region
      _
    $region5: #{encoder_forward_prepared.1} parent=1 // pred_fallthru
      _
    // Predicated region
    $region6: #{encoder_forward_prepared.1} parent=1 // pred_check
      _
    $region7: #{encoder_forward_prepared.1} parent=1 // pred_check_branch
      %16 = sbr.rel (0) target = $region9
    $region8: #{encoder_forward_prepared.1} parent=1 // pred_region
      _
    $region9: #{encoder_forward_prepared.1} parent=1 // pred_fallthru
      _
    // Predicated region
    $region10: #{encoder_forward_prepared.1} parent=1 // pred_check
      _
    $region11: #{encoder_forward_prepared.1} parent=1 // pred_check_branch
      %18 = sbr.rel (0) target = $region13
    $region12: #{encoder_forward_prepared.1} parent=1 // pred_region
      _
    $region13: #{encoder_forward_prepared.1} parent=1 // pred_fallthru
      _
    // Predicated region
    $region14: #{encoder_forward_prepared.1} parent=1 // pred_check
      _
    $region15: #{encoder_forward_prepared.1} parent=1 // pred_check_branch
      %20 = sbr.rel (0) target = $region17
    $region16: #{encoder_forward_prepared.1} parent=1 // pred_region
      _
    $region17: #{encoder_forward_prepared.1} parent=1 // pred_fallthru
      _
    // Predicated region
    $region18: #{encoder_forward_prepared.1} parent=1 // pred_check
      _
    $region19: #{encoder_forward_prepared.1} parent=1 // pred_check_branch
      %22 = sbr.rel (0) target = $region21
    $region20: #{encoder_forward_prepared.1} parent=1 // pred_region
      _
    $region21: #{encoder_forward_prepared.1} parent=1 // pred_fallthru
      _
    // Predicated region
    $region22: #{encoder_forward_prepared.1} parent=1 // pred_check
      _
    $region23: #{encoder_forward_prepared.1} parent=1 // pred_check_branch
      %24 = sbr.rel (0) target = $region25
    $region24: #{encoder_forward_prepared.1} parent=1 // pred_region
      %s26 = ssub.s32 16, 16
      %27 = vsyncadd [#allocation4], %s26
      %s29 = sshll.u32 %s5, 4
      %s30 = int_to_ptr.vmem [resolvable:$true] %s29
      %32 = dma.vmem_to_smem %s30, 16, [#allocation2], [#allocation4]
    $region25: #{encoder_forward_prepared.1} parent=1 // pred_fallthru
      _
    // Predicated region
    $region26: #{encoder_forward_prepared.1} parent=1 // pred_check
      _
    $region27: #{encoder_forward_prepared.1} parent=1 // pred_check_branch
      %34 = sbr.rel (0) target = $region29
    $region28: #{encoder_forward_prepared.1} parent=1 // pred_region
      %35 = dma.done [#allocation4], 16
    $region29: #{encoder_forward_prepared.1} parent=1 // pred_fallthru
      _
    %36 = sfence
    %v37 = vld [vmem:[%s0] sm:$0xff]
    %v38 = vld [vmem:[%s1] sm:$0xff]
    %v39 = vld [vmem:[%s1 + $0x8] sm:$0xff]
    %v40 = vld [vmem:[%s1 + $0x10] sm:$0xff]
    %v41 = vld [vmem:[%s1 + $0x18] sm:$0xff]
    %v42 = vld [vmem:[%s2] sm:$0x1]
    %v44 = vlaneseq
    %v45 = vshrl.u32 %v44, 7
    %v46 = vsub.s32 0, %v45
    %v47 = vrot.slane %v42, %v46
    %vm49 = vcmask 261120
    %v51 = vsel %vm49, %v37, 0
    %53 = vmatprep.subr.mxu0 0.0
    %v54 = vand.u32 %v38, 4294901760
    %55 = vmatpush1.msra.mxu0 %v54
    %56 = vmatprep.subr.mxu0 0.0
    %v57 = vand.u32 %v39, 4294901760
    %58 = vmatpush1.msra.mxu0 %v57
    %59 = vmatprep.subr.mxu0 0.0
    %v60 = vand.u32 %v40, 4294901760
    %61 = vmatpush1.msra.mxu0 %v60
    %62 = vmatprep.subr.mxu0 0.0
    %v63 = vand.u32 %v41, 4294901760
    %64 = vmatpush1.msra.mxu0 %v63
    %65 = vmatprep.subr.mxu0 0.0
    %66 = vmatpush1.msra.mxu0 0.0
    %67 = vmatprep.subr.mxu0 0.0
    %68 = vmatpush1.msra.mxu0 0.0
    %69 = vmatprep.subr.mxu0 0.0
    %70 = vmatpush1.msra.mxu0 0.0
    %71 = vmatprep.subr.mxu0 0.0
    %72 = vmatpush1.msra.mxu0 0.0
    %73 = vmatprep.subr.mxu0 0.0
    %74 = vmatpush1.msra.mxu0 0.0
    %75 = vmatprep.subr.mxu0 0.0
    %76 = vmatpush1.msra.mxu0 0.0
    %77 = vmatprep.subr.mxu0 0.0
    %78 = vmatpush1.msra.mxu0 0.0
    %79 = vmatprep.subr.mxu0 0.0
    %80 = vmatpush1.msra.mxu0 0.0
    %81 = vmatprep.subr.mxu0 0.0
    %82 = vmatpush1.msra.mxu0 0.0
    %83 = vmatprep.subr.mxu0 0.0
    %84 = vmatpush1.msra.mxu0 0.0
    %85 = vmatprep.subr.mxu0 0.0
    %86 = vmatpush1.msra.mxu0 0.0
    %87 = vmatprep.subr.mxu0 0.0
    %88 = vmatpush1.msra.mxu0 0.0
    %89 = vmatprep.subr.mxu0 0.0
    %90 = vmatpush1.msra.mxu0 0.0
    %91 = vmatprep.subr.mxu0 0.0
    %92 = vmatpush1.msra.mxu0 0.0
    %93 = vmatprep.subr.mxu0 0.0
    %94 = vmatpush1.msra.mxu0 0.0
    %95 = vmatprep.subr.mxu0 0.0
    %96 = vmatpush1.msra.mxu0 0.0
    %97 = vmatprep.subr.mxu0 0.0
    %98 = vmatpush1.msra.mxu0 0.0
    %99 = vmatprep.subr.mxu0 0.0
    %100 = vmatpush1.msra.mxu0 0.0
    %101 = vmatprep.subr.mxu0 0.0
    %102 = vmatpush1.msra.mxu0 0.0
    %103 = vmatprep.subr.mxu0 0.0
    %104 = vmatpush1.msra.mxu0 0.0
    %105 = vmatprep.subr.mxu0 0.0
    %106 = vmatpush1.msra.mxu0 0.0
    %107 = vmatprep.subr.mxu0 0.0
    %108 = vmatpush1.msra.mxu0 0.0
    %109 = vmatprep.subr.mxu0 0.0
    %110 = vmatpush1.msra.mxu0 0.0
    %111 = vmatprep.subr.mxu0 0.0
    %112 = vmatpush1.msra.mxu0 0.0
    %113 = vmatprep.subr.mxu0 0.0
    %114 = vmatpush1.msra.mxu0 0.0
    %115 = vmatprep.subr.mxu0 0.0
    %116 = vmatpush1.msra.mxu0 0.0
    %117 = vmatprep.subr.mxu0 0.0
    %118 = vmatpush1.msra.mxu0 0.0
    %119 = vmatprep.subr.mxu0 0.0
    %120 = vmatpush1.msra.mxu0 0.0
    %121 = vmatprep.mubr.f32.mxu0 0.0
    %v122 = vand.u32 %v51, 4294901760
    %v123 = vsub.f32 %v51, %v122
    %v124 = vand.u32 %v123, 4294901760
    %v125 = vsub.f32 %v123, %v124
    %v126 = vand.u32 %v125, 4294901760
    %127 = vmatmul.mubr.f32.gmra.mrb[0].mxu0 %v126
    %v128 = vpop.f32.mrb[0].mxu0
    %v129 = vadd.f32 %v47, %v128
    %v130 = vpop.f32.mrb[0].mxu0
    %131 = vdwg.mxu0
    %132 = vmatprep.subr.mxu0 0.0
    %v133 = vand.u32 %v38, 4294901760
    %v134 = vsub.f32 %v38, %v133
    %v135 = vand.u32 %v134, 4294901760
    %v136 = vsub.f32 %v134, %v135
    %v137 = vand.u32 %v136, 4294901760
    %138 = vmatpush1.msra.mxu0 %v137
    %139 = vmatprep.subr.mxu0 0.0
    %v140 = vand.u32 %v39, 4294901760
    %v141 = vsub.f32 %v39, %v140
    %v142 = vand.u32 %v141, 4294901760
    %v143 = vsub.f32 %v141, %v142
    %v144 = vand.u32 %v143, 4294901760
    %145 = vmatpush1.msra.mxu0 %v144
    %146 = vmatprep.subr.mxu0 0.0
    %v147 = vand.u32 %v40, 4294901760
    %v148 = vsub.f32 %v40, %v147
    %v149 = vand.u32 %v148, 4294901760
    %v150 = vsub.f32 %v148, %v149
    %v151 = vand.u32 %v150, 4294901760
    %152 = vmatpush1.msra.mxu0 %v151
    %153 = vmatprep.subr.mxu0 0.0
    %v154 = vand.u32 %v41, 4294901760
    %v155 = vsub.f32 %v41, %v154
    %v156 = vand.u32 %v155, 4294901760
    %v157 = vsub.f32 %v155, %v156
    %v158 = vand.u32 %v157, 4294901760
    %159 = vmatpush1.msra.mxu0 %v158
    %160 = vmatprep.subr.mxu0 0.0
    %161 = vmatpush1.msra.mxu0 0.0
    %162 = vmatprep.subr.mxu0 0.0
    %163 = vmatpush1.msra.mxu0 0.0
    %164 = vmatprep.subr.mxu0 0.0
    %165 = vmatpush1.msra.mxu0 0.0
    %166 = vmatprep.subr.mxu0 0.0
    %167 = vmatpush1.msra.mxu0 0.0
    %168 = vmatprep.subr.mxu0 0.0
    %169 = vmatpush1.msra.mxu0 0.0
    %170 = vmatprep.subr.mxu0 0.0
    %171 = vmatpush1.msra.mxu0 0.0
    %172 = vmatprep.subr.mxu0 0.0
    %173 = vmatpush1.msra.mxu0 0.0
    %174 = vmatprep.subr.mxu0 0.0
    %175 = vmatpush1.msra.mxu0 0.0
    %176 = vmatprep.subr.mxu0 0.0
    %177 = vmatpush1.msra.mxu0 0.0
    %178 = vmatprep.subr.mxu0 0.0
    %179 = vmatpush1.msra.mxu0 0.0
    %180 = vmatprep.subr.mxu0 0.0
    %181 = vmatpush1.msra.mxu0 0.0
    %182 = vmatprep.subr.mxu0 0.0
    %183 = vmatpush1.msra.mxu0 0.0
    %184 = vmatprep.subr.mxu0 0.0
    %185 = vmatpush1.msra.mxu0 0.0
    %186 = vmatprep.subr.mxu0 0.0
    %187 = vmatpush1.msra.mxu0 0.0
    %188 = vmatprep.subr.mxu0 0.0
    %189 = vmatpush1.msra.mxu0 0.0
    %190 = vmatprep.subr.mxu0 0.0
    %191 = vmatpush1.msra.mxu0 0.0
    %192 = vmatprep.subr.mxu0 0.0
    %193 = vmatpush1.msra.mxu0 0.0
    %194 = vmatprep.subr.mxu0 0.0
    %195 = vmatpush1.msra.mxu0 0.0
    %196 = vmatprep.subr.mxu0 0.0
    %197 = vmatpush1.msra.mxu0 0.0
    %198 = vmatprep.subr.mxu0 0.0
    %199 = vmatpush1.msra.mxu0 0.0
    %200 = vmatprep.subr.mxu0 0.0
    %201 = vmatpush1.msra.mxu0 0.0
    %202 = vmatprep.subr.mxu0 0.0
    %203 = vmatpush1.msra.mxu0 0.0
    %204 = vmatprep.subr.mxu0 0.0
    %205 = vmatpush1.msra.mxu0 0.0
    %206 = vmatprep.subr.mxu0 0.0
    %207 = vmatpush1.msra.mxu0 0.0
    %208 = vmatprep.subr.mxu0 0.0
    %209 = vmatpush1.msra.mxu0 0.0
    %210 = vmatprep.subr.mxu0 0.0
    %211 = vmatpush1.msra.mxu0 0.0
    %212 = vmatprep.subr.mxu0 0.0
    %213 = vmatpush1.msra.mxu0 0.0
    %214 = vmatprep.subr.mxu0 0.0
    %215 = vmatpush1.msra.mxu0 0.0
    %216 = vmatprep.mubr.f32.mxu0 0.0
    %v217 = vand.u32 %v51, 4294901760
    %218 = vmatmul.mubr.f32.gmra.mrb[0].mxu0 %v217
    %v219 = vpop.f32.mrb[0].mxu0
    %v220 = vadd.f32 %v129, %v219
    %v221 = vpop.f32.mrb[0].mxu0
    %222 = vdwg.mxu0
    %223 = vmatprep.subr.mxu0 0.0
    %v224 = vand.u32 %v38, 4294901760
    %v225 = vsub.f32 %v38, %v224
    %226 = vmatpush1.msra.mxu0 %v225
    %227 = vmatprep.subr.mxu0 0.0
    %v228 = vand.u32 %v39, 4294901760
    %v229 = vsub.f32 %v39, %v228
    %230 = vmatpush1.msra.mxu0 %v229
    %231 = vmatprep.subr.mxu0 0.0
    %v232 = vand.u32 %v40, 4294901760
    %v233 = vsub.f32 %v40, %v232
    %234 = vmatpush1.msra.mxu0 %v233
    %235 = vmatprep.subr.mxu0 0.0
    %v236 = vand.u32 %v41, 4294901760
    %v237 = vsub.f32 %v41, %v236
    %238 = vmatpush1.msra.mxu0 %v237
    %239 = vmatprep.subr.mxu0 0.0
    %240 = vmatpush1.msra.mxu0 0.0
    %241 = vmatprep.subr.mxu0 0.0
    %242 = vmatpush1.msra.mxu0 0.0
    %243 = vmatprep.subr.mxu0 0.0
    %244 = vmatpush1.msra.mxu0 0.0
    %245 = vmatprep.subr.mxu0 0.0
    %246 = vmatpush1.msra.mxu0 0.0
    %247 = vmatprep.subr.mxu0 0.0
    %248 = vmatpush1.msra.mxu0 0.0
    %249 = vmatprep.subr.mxu0 0.0
    %250 = vmatpush1.msra.mxu0 0.0
    %251 = vmatprep.subr.mxu0 0.0
    %252 = vmatpush1.msra.mxu0 0.0
    %253 = vmatprep.subr.mxu0 0.0
    %254 = vmatpush1.msra.mxu0 0.0
    %255 = vmatprep.subr.mxu0 0.0
    %256 = vmatpush1.msra.mxu0 0.0
    %257 = vmatprep.subr.mxu0 0.0
    %258 = vmatpush1.msra.mxu0 0.0
    %259 = vmatprep.subr.mxu0 0.0
    %260 = vmatpush1.msra.mxu0 0.0
    %261 = vmatprep.subr.mxu0 0.0
    %262 = vmatpush1.msra.mxu0 0.0
    %263 = vmatprep.subr.mxu0 0.0
    %264 = vmatpush1.msra.mxu0 0.0
    %265 = vmatprep.subr.mxu0 0.0
    %266 = vmatpush1.msra.mxu0 0.0
    %267 = vmatprep.subr.mxu0 0.0
    %268 = vmatpush1.msra.mxu0 0.0
    %269 = vmatprep.subr.mxu0 0.0
    %270 = vmatpush1.msra.mxu0 0.0
    %271 = vmatprep.subr.mxu0 0.0
    %272 = vmatpush1.msra.mxu0 0.0
    %273 = vmatprep.subr.mxu0 0.0
    %274 = vmatpush1.msra.mxu0 0.0
    %275 = vmatprep.subr.mxu0 0.0
    %276 = vmatpush1.msra.mxu0 0.0
    %277 = vmatprep.subr.mxu0 0.0
    %278 = vmatpush1.msra.mxu0 0.0
    %279 = vmatprep.subr.mxu0 0.0
    %280 = vmatpush1.msra.mxu0 0.0
    %281 = vmatprep.subr.mxu0 0.0
    %282 = vmatpush1.msra.mxu0 0.0
    %283 = vmatprep.subr.mxu0 0.0
    %284 = vmatpush1.msra.mxu0 0.0
    %285 = vmatprep.subr.mxu0 0.0
    %286 = vmatpush1.msra.mxu0 0.0
    %287 = vmatprep.subr.mxu0 0.0
    %288 = vmatpush1.msra.mxu0 0.0
    %289 = vmatprep.subr.mxu0 0.0
    %290 = vmatpush1.msra.mxu0 0.0
    %291 = vmatprep.subr.mxu0 0.0
    %292 = vmatpush1.msra.mxu0 0.0
    %293 = vmatprep.subr.mxu0 0.0
    %294 = vmatpush1.msra.mxu0 0.0
    %295 = vmatprep.mubr.f32.mxu0 0.0
    %v296 = vand.u32 %v51, 4294901760
    %v297 = vsub.f32 %v51, %v296
    %298 = vmatmul.mubr.f32.gmra.mrb[0].mxu0 %v297
    %v299 = vpop.f32.mrb[0].mxu0
    %v300 = vadd.f32 %v220, %v299
    %v301 = vpop.f32.mrb[0].mxu0
    %302 = vdwg.mxu0
    %303 = vmatprep.subr.mxu0 0.0
    %v304 = vand.u32 %v38, 4294901760
    %305 = vmatpush1.msra.mxu0 %v304
    %306 = vmatprep.subr.mxu0 0.0
    %v307 = vand.u32 %v39, 4294901760
    %308 = vmatpush1.msra.mxu0 %v307
    %309 = vmatprep.subr.mxu0 0.0
    %v310 = vand.u32 %v40, 4294901760
    %311 = vmatpush1.msra.mxu0 %v310
    %312 = vmatprep.subr.mxu0 0.0
    %v313 = vand.u32 %v41, 4294901760
    %314 = vmatpush1.msra.mxu0 %v313
    %315 = vmatprep.subr.mxu0 0.0
    %316 = vmatpush1.msra.mxu0 0.0
    %317 = vmatprep.subr.mxu0 0.0
    %318 = vmatpush1.msra.mxu0 0.0
    %319 = vmatprep.subr.mxu0 0.0
    %320 = vmatpush1.msra.mxu0 0.0
    %321 = vmatprep.subr.mxu0 0.0
    %322 = vmatpush1.msra.mxu0 0.0
    %323 = vmatprep.subr.mxu0 0.0
    %324 = vmatpush1.msra.mxu0 0.0
    %325 = vmatprep.subr.mxu0 0.0
    %326 = vmatpush1.msra.mxu0 0.0
    %327 = vmatprep.subr.mxu0 0.0
    %328 = vmatpush1.msra.mxu0 0.0
    %329 = vmatprep.subr.mxu0 0.0
    %330 = vmatpush1.msra.mxu0 0.0
    %331 = vmatprep.subr.mxu0 0.0
    %332 = vmatpush1.msra.mxu0 0.0
    %333 = vmatprep.subr.mxu0 0.0
    %334 = vmatpush1.msra.mxu0 0.0
    %335 = vmatprep.subr.mxu0 0.0
    %336 = vmatpush1.msra.mxu0 0.0
    %337 = vmatprep.subr.mxu0 0.0
    %338 = vmatpush1.msra.mxu0 0.0
    %339 = vmatprep.subr.mxu0 0.0
    %340 = vmatpush1.msra.mxu0 0.0
    %341 = vmatprep.subr.mxu0 0.0
    %342 = vmatpush1.msra.mxu0 0.0
    %343 = vmatprep.subr.mxu0 0.0
    %344 = vmatpush1.msra.mxu0 0.0
    %345 = vmatprep.subr.mxu0 0.0
    %346 = vmatpush1.msra.mxu0 0.0
    %347 = vmatprep.subr.mxu0 0.0
    %348 = vmatpush1.msra.mxu0 0.0
    %349 = vmatprep.subr.mxu0 0.0
    %350 = vmatpush1.msra.mxu0 0.0
    %351 = vmatprep.subr.mxu0 0.0
    %352 = vmatpush1.msra.mxu0 0.0
    %353 = vmatprep.subr.mxu0 0.0
    %354 = vmatpush1.msra.mxu0 0.0
    %355 = vmatprep.subr.mxu0 0.0
    %356 = vmatpush1.msra.mxu0 0.0
    %357 = vmatprep.subr.mxu0 0.0
    %358 = vmatpush1.msra.mxu0 0.0
    %359 = vmatprep.subr.mxu0 0.0
    %360 = vmatpush1.msra.mxu0 0.0
    %361 = vmatprep.subr.mxu0 0.0
    %362 = vmatpush1.msra.mxu0 0.0
    %363 = vmatprep.subr.mxu0 0.0
    %364 = vmatpush1.msra.mxu0 0.0
    %365 = vmatprep.subr.mxu0 0.0
    %366 = vmatpush1.msra.mxu0 0.0
    %367 = vmatprep.subr.mxu0 0.0
    %368 = vmatpush1.msra.mxu0 0.0
    %369 = vmatprep.subr.mxu0 0.0
    %370 = vmatpush1.msra.mxu0 0.0
    %371 = vmatprep.mubr.f32.mxu0 0.0
    %v372 = vand.u32 %v51, 4294901760
    %v373 = vsub.f32 %v51, %v372
    %v374 = vand.u32 %v373, 4294901760
    %375 = vmatmul.mubr.f32.gmra.mrb[0].mxu0 %v374
    %v376 = vpop.f32.mrb[0].mxu0
    %v377 = vadd.f32 %v300, %v376
    %v378 = vpop.f32.mrb[0].mxu0
    %379 = vdwg.mxu0
    %380 = vmatprep.subr.mxu0 0.0
    %v381 = vand.u32 %v38, 4294901760
    %v382 = vsub.f32 %v38, %v381
    %v383 = vand.u32 %v382, 4294901760
    %384 = vmatpush1.msra.mxu0 %v383
    %385 = vmatprep.subr.mxu0 0.0
    %v386 = vand.u32 %v39, 4294901760
    %v387 = vsub.f32 %v39, %v386
    %v388 = vand.u32 %v387, 4294901760
    %389 = vmatpush1.msra.mxu0 %v388
    %390 = vmatprep.subr.mxu0 0.0
    %v391 = vand.u32 %v40, 4294901760
    %v392 = vsub.f32 %v40, %v391
    %v393 = vand.u32 %v392, 4294901760
    %394 = vmatpush1.msra.mxu0 %v393
    %395 = vmatprep.subr.mxu0 0.0
    %v396 = vand.u32 %v41, 4294901760
    %v397 = vsub.f32 %v41, %v396
    %v398 = vand.u32 %v397, 4294901760
    %399 = vmatpush1.msra.mxu0 %v398
    %400 = vmatprep.subr.mxu0 0.0
    %401 = vmatpush1.msra.mxu0 0.0
    %402 = vmatprep.subr.mxu0 0.0
    %403 = vmatpush1.msra.mxu0 0.0
    %404 = vmatprep.subr.mxu0 0.0
    %405 = vmatpush1.msra.mxu0 0.0
    %406 = vmatprep.subr.mxu0 0.0
    %407 = vmatpush1.msra.mxu0 0.0
    %408 = vmatprep.subr.mxu0 0.0
    %409 = vmatpush1.msra.mxu0 0.0
    %410 = vmatprep.subr.mxu0 0.0
    %411 = vmatpush1.msra.mxu0 0.0
    %412 = vmatprep.subr.mxu0 0.0
    %413 = vmatpush1.msra.mxu0 0.0
    %414 = vmatprep.subr.mxu0 0.0
    %415 = vmatpush1.msra.mxu0 0.0
    %416 = vmatprep.subr.mxu0 0.0
    %417 = vmatpush1.msra.mxu0 0.0
    %418 = vmatprep.subr.mxu0 0.0
    %419 = vmatpush1.msra.mxu0 0.0
    %420 = vmatprep.subr.mxu0 0.0
    %421 = vmatpush1.msra.mxu0 0.0
    %422 = vmatprep.subr.mxu0 0.0
    %423 = vmatpush1.msra.mxu0 0.0
    %424 = vmatprep.subr.mxu0 0.0
    %425 = vmatpush1.msra.mxu0 0.0
    %426 = vmatprep.subr.mxu0 0.0
    %427 = vmatpush1.msra.mxu0 0.0
    %428 = vmatprep.subr.mxu0 0.0
    %429 = vmatpush1.msra.mxu0 0.0
    %430 = vmatprep.subr.mxu0 0.0
    %431 = vmatpush1.msra.mxu0 0.0
    %432 = vmatprep.subr.mxu0 0.0
    %433 = vmatpush1.msra.mxu0 0.0
    %434 = vmatprep.subr.mxu0 0.0
    %435 = vmatpush1.msra.mxu0 0.0
    %436 = vmatprep.subr.mxu0 0.0
    %437 = vmatpush1.msra.mxu0 0.0
    %438 = vmatprep.subr.mxu0 0.0
    %439 = vmatpush1.msra.mxu0 0.0
    %440 = vmatprep.subr.mxu0 0.0
    %441 = vmatpush1.msra.mxu0 0.0
    %442 = vmatprep.subr.mxu0 0.0
    %443 = vmatpush1.msra.mxu0 0.0
    %444 = vmatprep.subr.mxu0 0.0
    %445 = vmatpush1.msra.mxu0 0.0
    %446 = vmatprep.subr.mxu0 0.0
    %447 = vmatpush1.msra.mxu0 0.0
    %448 = vmatprep.subr.mxu0 0.0
    %449 = vmatpush1.msra.mxu0 0.0
    %450 = vmatprep.subr.mxu0 0.0
    %451 = vmatpush1.msra.mxu0 0.0
    %452 = vmatprep.subr.mxu0 0.0
    %453 = vmatpush1.msra.mxu0 0.0
    %454 = vmatprep.subr.mxu0 0.0
    %455 = vmatpush1.msra.mxu0 0.0
    %456 = vmatprep.mubr.f32.mxu0 0.0
    %v457 = vand.u32 %v51, 4294901760
    %458 = vmatmul.mubr.f32.gmra.mrb[0].mxu0 %v457
    %v459 = vpop.f32.mrb[0].mxu0
    %v460 = vadd.f32 %v377, %v459
    %v461 = vpop.f32.mrb[0].mxu0
    %462 = vdwg.mxu0
    %463 = vmatprep.subr.mxu0 0.0
    %v464 = vand.u32 %v38, 4294901760
    %465 = vmatpush1.msra.mxu0 %v464
    %466 = vmatprep.subr.mxu0 0.0
    %v467 = vand.u32 %v39, 4294901760
    %468 = vmatpush1.msra.mxu0 %v467
    %469 = vmatprep.subr.mxu0 0.0
    %v470 = vand.u32 %v40, 4294901760
    %471 = vmatpush1.msra.mxu0 %v470
    %472 = vmatprep.subr.mxu0 0.0
    %v473 = vand.u32 %v41, 4294901760
    %474 = vmatpush1.msra.mxu0 %v473
    %475 = vmatprep.subr.mxu0 0.0
    %476 = vmatpush1.msra.mxu0 0.0
    %477 = vmatprep.subr.mxu0 0.0
    %478 = vmatpush1.msra.mxu0 0.0
    %479 = vmatprep.subr.mxu0 0.0
    %480 = vmatpush1.msra.mxu0 0.0
    %481 = vmatprep.subr.mxu0 0.0
    %482 = vmatpush1.msra.mxu0 0.0
    %483 = vmatprep.subr.mxu0 0.0
    %484 = vmatpush1.msra.mxu0 0.0
    %485 = vmatprep.subr.mxu0 0.0
    %486 = vmatpush1.msra.mxu0 0.0
    %487 = vmatprep.subr.mxu0 0.0
    %488 = vmatpush1.msra.mxu0 0.0
    %489 = vmatprep.subr.mxu0 0.0
    %490 = vmatpush1.msra.mxu0 0.0
    %491 = vmatprep.subr.mxu0 0.0
    %492 = vmatpush1.msra.mxu0 0.0
    %493 = vmatprep.subr.mxu0 0.0
    %494 = vmatpush1.msra.mxu0 0.0
    %495 = vmatprep.subr.mxu0 0.0
    %496 = vmatpush1.msra.mxu0 0.0
    %497 = vmatprep.subr.mxu0 0.0
    %498 = vmatpush1.msra.mxu0 0.0
    %499 = vmatprep.subr.mxu0 0.0
    %500 = vmatpush1.msra.mxu0 0.0
    %501 = vmatprep.subr.mxu0 0.0
    %502 = vmatpush1.msra.mxu0 0.0
    %503 = vmatprep.subr.mxu0 0.0
    %504 = vmatpush1.msra.mxu0 0.0
    %505 = vmatprep.subr.mxu0 0.0
    %506 = vmatpush1.msra.mxu0 0.0
    %507 = vmatprep.subr.mxu0 0.0
    %508 = vmatpush1.msra.mxu0 0.0
    %509 = vmatprep.subr.mxu0 0.0
    %510 = vmatpush1.msra.mxu0 0.0
    %511 = vmatprep.subr.mxu0 0.0
    %512 = vmatpush1.msra.mxu0 0.0
    %513 = vmatprep.subr.mxu0 0.0
    %514 = vmatpush1.msra.mxu0 0.0
    %515 = vmatprep.subr.mxu0 0.0
    %516 = vmatpush1.msra.mxu0 0.0
    %517 = vmatprep.subr.mxu0 0.0
    %518 = vmatpush1.msra.mxu0 0.0
    %519 = vmatprep.subr.mxu0 0.0
    %520 = vmatpush1.msra.mxu0 0.0
    %521 = vmatprep.subr.mxu0 0.0
    %522 = vmatpush1.msra.mxu0 0.0
    %523 = vmatprep.subr.mxu0 0.0
    %524 = vmatpush1.msra.mxu0 0.0
    %525 = vmatprep.subr.mxu0 0.0
    %526 = vmatpush1.msra.mxu0 0.0
    %527 = vmatprep.subr.mxu0 0.0
    %528 = vmatpush1.msra.mxu0 0.0
    %529 = vmatprep.subr.mxu0 0.0
    %530 = vmatpush1.msra.mxu0 0.0
    %531 = vmatprep.mubr.f32.mxu0 0.0
    %v532 = vand.u32 %v51, 4294901760
    %533 = vmatmul.mubr.f32.gmra.mrb[0].mxu0 %v532
    %v534 = vpop.f32.mrb[0].mxu0
    %v535 = vadd.f32 %v460, %v534
    %v536 = vpop.f32.mrb[0].mxu0
    %537 = vdwg.mxu0
    %s538 = sld [smem:[#allocation2]]
    %s539 = sld [smem:[#allocation2 + $0x1]]
    %v540 = vxor.u32 %v535, 2147483648
    %v541 = vmul.f32 %v540, 1.442695
    %v542 = vpow.pop %v541
    %v543 = vadd.f32 %v542, 1.0
    %v544 = vrcp.pop %v543
    %v545 = vmul.f32 1.0, %v544
    %v546 = vstv %s538
    %v547 = vmul.f32 %v545, %v546
    %v548 = vstv %s539
    %v549 = vadd.f32 %v547, %v548
    %v550 = vld [vmem:[%s3] sm:$0xff]
    %v551 = vld [vmem:[%s3 + $0x8] sm:$0xff]
    %v552 = vld [vmem:[%s3 + $0x10] sm:$0xff]
    %v553 = vld [vmem:[%s3 + $0x18] sm:$0xff]
    %v554 = vld [vmem:[%s3 + $0x20] sm:$0xff]
    %v555 = vld [vmem:[%s3 + $0x28] sm:$0xff]
    %v556 = vld [vmem:[%s3 + $0x30] sm:$0xff]
    %v557 = vld [vmem:[%s3 + $0x38] sm:$0xff]
    %v558 = vld [vmem:[%s4] sm:$0x1]
    %v560 = vlaneseq
    %v561 = vshrl.u32 %v560, 7
    %v562 = vsub.s32 0, %v561
    %v563 = vrot.slane %v558, %v562
    %vm565 = vcmask 523264
    %v567 = vsel %vm565, %v549, 0
    %569 = vmatprep.subr.mxu0 0.0
    %v570 = vand.u32 %v550, 4294901760
    %571 = vmatpush1.msra.mxu0 %v570
    %572 = vmatprep.subr.mxu0 0.0
    %v573 = vand.u32 %v551, 4294901760
    %574 = vmatpush1.msra.mxu0 %v573
    %575 = vmatprep.subr.mxu0 0.0
    %v576 = vand.u32 %v552, 4294901760
    %577 = vmatpush1.msra.mxu0 %v576
    %578 = vmatprep.subr.mxu0 0.0
    %v579 = vand.u32 %v553, 4294901760
    %580 = vmatpush1.msra.mxu0 %v579
    %581 = vmatprep.subr.mxu0 0.0
    %v582 = vand.u32 %v554, 4294901760
    %583 = vmatpush1.msra.mxu0 %v582
    %584 = vmatprep.subr.mxu0 0.0
    %v585 = vand.u32 %v555, 4294901760
    %586 = vmatpush1.msra.mxu0 %v585
    %587 = vmatprep.subr.mxu0 0.0
    %v588 = vand.u32 %v556, 4294901760
    %589 = vmatpush1.msra.mxu0 %v588
    %590 = vmatprep.subr.mxu0 0.0
    %v591 = vand.u32 %v557, 4294901760
    %592 = vmatpush1.msra.mxu0 %v591
    %593 = vmatprep.subr.mxu0 0.0
    %594 = vmatpush1.msra.mxu0 0.0
    %595 = vmatprep.subr.mxu0 0.0
    %596 = vmatpush1.msra.mxu0 0.0
    %597 = vmatprep.subr.mxu0 0.0
    %598 = vmatpush1.msra.mxu0 0.0
    %599 = vmatprep.subr.mxu0 0.0
    %600 = vmatpush1.msra.mxu0 0.0
    %601 = vmatprep.subr.mxu0 0.0
    %602 = vmatpush1.msra.mxu0 0.0
    %603 = vmatprep.subr.mxu0 0.0
    %604 = vmatpush1.msra.mxu0 0.0
    %605 = vmatprep.subr.mxu0 0.0
    %606 = vmatpush1.msra.mxu0 0.0
    %607 = vmatprep.subr.mxu0 0.0
    %608 = vmatpush1.msra.mxu0 0.0
    %609 = vmatprep.subr.mxu0 0.0
    %610 = vmatpush1.msra.mxu0 0.0
    %611 = vmatprep.subr.mxu0 0.0
    %612 = vmatpush1.msra.mxu0 0.0
    %613 = vmatprep.subr.mxu0 0.0
    %614 = vmatpush1.msra.mxu0 0.0
    %615 = vmatprep.subr.mxu0 0.0
    %616 = vmatpush1.msra.mxu0 0.0
    %617 = vmatprep.subr.mxu0 0.0
    %618 = vmatpush1.msra.mxu0 0.0
    %619 = vmatprep.subr.mxu0 0.0
    %620 = vmatpush1.msra.mxu0 0.0
    %621 = vmatprep.subr.mxu0 0.0
    %622 = vmatpush1.msra.mxu0 0.0
    %623 = vmatprep.subr.mxu0 0.0
    %624 = vmatpush1.msra.mxu0 0.0
    %625 = vmatprep.subr.mxu0 0.0
    %626 = vmatpush1.msra.mxu0 0.0
    %627 = vmatprep.subr.mxu0 0.0
    %628 = vmatpush1.msra.mxu0 0.0
    %629 = vmatprep.subr.mxu0 0.0
    %630 = vmatpush1.msra.mxu0 0.0
    %631 = vmatprep.subr.mxu0 0.0
    %632 = vmatpush1.msra.mxu0 0.0
    %633 = vmatprep.subr.mxu0 0.0
    %634 = vmatpush1.msra.mxu0 0.0
    %635 = vmatprep.subr.mxu0 0.0
    %636 = vmatpush1.msra.mxu0 0.0
    %637 = vmatprep.subr.mxu0 0.0
    %638 = vmatpush1.msra.mxu0 0.0
    %639 = vmatprep.subr.mxu0 0.0
    %640 = vmatpush1.msra.mxu0 0.0
    %641 = vmatprep.mubr.f32.mxu0 0.0
    %v642 = vand.u32 %v567, 4294901760
    %v643 = vsub.f32 %v567, %v642
    %v644 = vand.u32 %v643, 4294901760
    %v645 = vsub.f32 %v643, %v644
    %v646 = vand.u32 %v645, 4294901760
    %647 = vmatmul.mubr.f32.gmra.mrb[0].mxu0 %v646
    %v648 = vpop.f32.mrb[0].mxu0
    %v649 = vadd.f32 %v563, %v648
    %v650 = vpop.f32.mrb[0].mxu0
    %651 = vdwg.mxu0
    %652 = vmatprep.subr.mxu0 0.0
    %v653 = vand.u32 %v550, 4294901760
    %v654 = vsub.f32 %v550, %v653
    %v655 = vand.u32 %v654, 4294901760
    %v656 = vsub.f32 %v654, %v655
    %v657 = vand.u32 %v656, 4294901760
    %658 = vmatpush1.msra.mxu0 %v657
    %659 = vmatprep.subr.mxu0 0.0
    %v660 = vand.u32 %v551, 4294901760
    %v661 = vsub.f32 %v551, %v660
    %v662 = vand.u32 %v661, 4294901760
    %v663 = vsub.f32 %v661, %v662
    %v664 = vand.u32 %v663, 4294901760
    %665 = vmatpush1.msra.mxu0 %v664
    %666 = vmatprep.subr.mxu0 0.0
    %v667 = vand.u32 %v552, 4294901760
    %v668 = vsub.f32 %v552, %v667
    %v669 = vand.u32 %v668, 4294901760
    %v670 = vsub.f32 %v668, %v669
    %v671 = vand.u32 %v670, 4294901760
    %672 = vmatpush1.msra.mxu0 %v671
    %673 = vmatprep.subr.mxu0 0.0
    %v674 = vand.u32 %v553, 4294901760
    %v675 = vsub.f32 %v553, %v674
    %v676 = vand.u32 %v675, 4294901760
    %v677 = vsub.f32 %v675, %v676
    %v678 = vand.u32 %v677, 4294901760
    %679 = vmatpush1.msra.mxu0 %v678
    %680 = vmatprep.subr.mxu0 0.0
    %v681 = vand.u32 %v554, 4294901760
    %v682 = vsub.f32 %v554, %v681
    %v683 = vand.u32 %v682, 4294901760
    %v684 = vsub.f32 %v682, %v683
    %v685 = vand.u32 %v684, 4294901760
    %686 = vmatpush1.msra.mxu0 %v685
    %687 = vmatprep.subr.mxu0 0.0
    %v688 = vand.u32 %v555, 4294901760
    %v689 = vsub.f32 %v555, %v688
    %v690 = vand.u32 %v689, 4294901760
    %v691 = vsub.f32 %v689, %v690
    %v692 = vand.u32 %v691, 4294901760
    %693 = vmatpush1.msra.mxu0 %v692
    %694 = vmatprep.subr.mxu0 0.0
    %v695 = vand.u32 %v556, 4294901760
    %v696 = vsub.f32 %v556, %v695
    %v697 = vand.u32 %v696, 4294901760
    %v698 = vsub.f32 %v696, %v697
    %v699 = vand.u32 %v698, 4294901760
    %700 = vmatpush1.msra.mxu0 %v699
    %701 = vmatprep.subr.mxu0 0.0
    %v702 = vand.u32 %v557, 4294901760
    %v703 = vsub.f32 %v557, %v702
    %v704 = vand.u32 %v703, 4294901760
    %v705 = vsub.f32 %v703, %v704
    %v706 = vand.u32 %v705, 4294901760
    %707 = vmatpush1.msra.mxu0 %v706
    %708 = vmatprep.subr.mxu0 0.0
    %709 = vmatpush1.msra.mxu0 0.0
    %710 = vmatprep.subr.mxu0 0.0
    %711 = vmatpush1.msra.mxu0 0.0
    %712 = vmatprep.subr.mxu0 0.0
    %713 = vmatpush1.msra.mxu0 0.0
    %714 = vmatprep.subr.mxu0 0.0
    %715 = vmatpush1.msra.mxu0 0.0
    %716 = vmatprep.subr.mxu0 0.0
    %717 = vmatpush1.msra.mxu0 0.0
    %718 = vmatprep.subr.mxu0 0.0
    %719 = vmatpush1.msra.mxu0 0.0
    %720 = vmatprep.subr.mxu0 0.0
    %721 = vmatpush1.msra.mxu0 0.0
    %722 = vmatprep.subr.mxu0 0.0
    %723 = vmatpush1.msra.mxu0 0.0
    %724 = vmatprep.subr.mxu0 0.0
    %725 = vmatpush1.msra.mxu0 0.0
    %726 = vmatprep.subr.mxu0 0.0
    %727 = vmatpush1.msra.mxu0 0.0
    %728 = vmatprep.subr.mxu0 0.0
    %729 = vmatpush1.msra.mxu0 0.0
    %730 = vmatprep.subr.mxu0 0.0
    %731 = vmatpush1.msra.mxu0 0.0
    %732 = vmatprep.subr.mxu0 0.0
    %733 = vmatpush1.msra.mxu0 0.0
    %734 = vmatprep.subr.mxu0 0.0
    %735 = vmatpush1.msra.mxu0 0.0
    %736 = vmatprep.subr.mxu0 0.0
    %737 = vmatpush1.msra.mxu0 0.0
    %738 = vmatprep.subr.mxu0 0.0
    %739 = vmatpush1.msra.mxu0 0.0
    %740 = vmatprep.subr.mxu0 0.0
    %741 = vmatpush1.msra.mxu0 0.0
    %742 = vmatprep.subr.mxu0 0.0
    %743 = vmatpush1.msra.mxu0 0.0
    %744 = vmatprep.subr.mxu0 0.0
    %745 = vmatpush1.msra.mxu0 0.0
    %746 = vmatprep.subr.mxu0 0.0
    %747 = vmatpush1.msra.mxu0 0.0
    %748 = vmatprep.subr.mxu0 0.0
    %749 = vmatpush1.msra.mxu0 0.0
    %750 = vmatprep.subr.mxu0 0.0
    %751 = vmatpush1.msra.mxu0 0.0
    %752 = vmatprep.subr.mxu0 0.0
    %753 = vmatpush1.msra.mxu0 0.0
    %754 = vmatprep.subr.mxu0 0.0
    %755 = vmatpush1.msra.mxu0 0.0
    %756 = vmatprep.mubr.f32.mxu0 0.0
    %v757 = vand.u32 %v567, 4294901760
    %758 = vmatmul.mubr.f32.gmra.mrb[0].mxu0 %v757
    %v759 = vpop.f32.mrb[0].mxu0
    %v760 = vadd.f32 %v649, %v759
    %v761 = vpop.f32.mrb[0].mxu0
    %762 = vdwg.mxu0
    %763 = vmatprep.subr.mxu0 0.0
    %v764 = vand.u32 %v550, 4294901760
    %v765 = vsub.f32 %v550, %v764
    %766 = vmatpush1.msra.mxu0 %v765
    %767 = vmatprep.subr.mxu0 0.0
    %v768 = vand.u32 %v551, 4294901760
    %v769 = vsub.f32 %v551, %v768
    %770 = vmatpush1.msra.mxu0 %v769
    %771 = vmatprep.subr.mxu0 0.0
    %v772 = vand.u32 %v552, 4294901760
    %v773 = vsub.f32 %v552, %v772
    %774 = vmatpush1.msra.mxu0 %v773
    %775 = vmatprep.subr.mxu0 0.0
    %v776 = vand.u32 %v553, 4294901760
    %v777 = vsub.f32 %v553, %v776
    %778 = vmatpush1.msra.mxu0 %v777
    %779 = vmatprep.subr.mxu0 0.0
    %v780 = vand.u32 %v554, 4294901760
    %v781 = vsub.f32 %v554, %v780
    %782 = vmatpush1.msra.mxu0 %v781
    %783 = vmatprep.subr.mxu0 0.0
    %v784 = vand.u32 %v555, 4294901760
    %v785 = vsub.f32 %v555, %v784
    %786 = vmatpush1.msra.mxu0 %v785
    %787 = vmatprep.subr.mxu0 0.0
    %v788 = vand.u32 %v556, 4294901760
    %v789 = vsub.f32 %v556, %v788
    %790 = vmatpush1.msra.mxu0 %v789
    %791 = vmatprep.subr.mxu0 0.0
    %v792 = vand.u32 %v557, 4294901760
    %v793 = vsub.f32 %v557, %v792
    %794 = vmatpush1.msra.mxu0 %v793
    %795 = vmatprep.subr.mxu0 0.0
    %796 = vmatpush1.msra.mxu0 0.0
    %797 = vmatprep.subr.mxu0 0.0
    %798 = vmatpush1.msra.mxu0 0.0
    %799 = vmatprep.subr.mxu0 0.0
    %800 = vmatpush1.msra.mxu0 0.0
    %801 = vmatprep.subr.mxu0 0.0
    %802 = vmatpush1.msra.mxu0 0.0
    %803 = vmatprep.subr.mxu0 0.0
    %804 = vmatpush1.msra.mxu0 0.0
    %805 = vmatprep.subr.mxu0 0.0
    %806 = vmatpush1.msra.mxu0 0.0
    %807 = vmatprep.subr.mxu0 0.0
    %808 = vmatpush1.msra.mxu0 0.0
    %809 = vmatprep.subr.mxu0 0.0
    %810 = vmatpush1.msra.mxu0 0.0
    %811 = vmatprep.subr.mxu0 0.0
    %812 = vmatpush1.msra.mxu0 0.0
    %813 = vmatprep.subr.mxu0 0.0
    %814 = vmatpush1.msra.mxu0 0.0
    %815 = vmatprep.subr.mxu0 0.0
    %816 = vmatpush1.msra.mxu0 0.0
    %817 = vmatprep.subr.mxu0 0.0
    %818 = vmatpush1.msra.mxu0 0.0
    %819 = vmatprep.subr.mxu0 0.0
    %820 = vmatpush1.msra.mxu0 0.0
    %821 = vmatprep.subr.mxu0 0.0
    %822 = vmatpush1.msra.mxu0 0.0
    %823 = vmatprep.subr.mxu0 0.0
    %824 = vmatpush1.msra.mxu0 0.0
    %825 = vmatprep.subr.mxu0 0.0
    %826 = vmatpush1.msra.mxu0 0.0
    %827 = vmatprep.subr.mxu0 0.0
    %828 = vmatpush1.msra.mxu0 0.0
    %829 = vmatprep.subr.mxu0 0.0
    %830 = vmatpush1.msra.mxu0 0.0
    %831 = vmatprep.subr.mxu0 0.0
    %832 = vmatpush1.msra.mxu0 0.0
    %833 = vmatprep.subr.mxu0 0.0
    %834 = vmatpush1.msra.mxu0 0.0
    %835 = vmatprep.subr.mxu0 0.0
    %836 = vmatpush1.msra.mxu0 0.0
    %837 = vmatprep.subr.mxu0 0.0
    %838 = vmatpush1.msra.mxu0 0.0
    %839 = vmatprep.subr.mxu0 0.0
    %840 = vmatpush1.msra.mxu0 0.0
    %841 = vmatprep.subr.mxu0 0.0
    %842 = vmatpush1.msra.mxu0 0.0
    %843 = vmatprep.mubr.f32.mxu0 0.0
    %v844 = vand.u32 %v567, 4294901760
    %v845 = vsub.f32 %v567, %v844
    %846 = vmatmul.mubr.f32.gmra.mrb[0].mxu0 %v845
    %v847 = vpop.f32.mrb[0].mxu0
    %v848 = vadd.f32 %v760, %v847
    %v849 = vpop.f32.mrb[0].mxu0
    %850 = vdwg.mxu0
    %851 = vmatprep.subr.mxu0 0.0
    %v852 = vand.u32 %v550, 4294901760
    %853 = vmatpush1.msra.mxu0 %v852
    %854 = vmatprep.subr.mxu0 0.0
    %v855 = vand.u32 %v551, 4294901760
    %856 = vmatpush1.msra.mxu0 %v855
    %857 = vmatprep.subr.mxu0 0.0
    %v858 = vand.u32 %v552, 4294901760
    %859 = vmatpush1.msra.mxu0 %v858
    %860 = vmatprep.subr.mxu0 0.0
    %v861 = vand.u32 %v553, 4294901760
    %862 = vmatpush1.msra.mxu0 %v861
    %863 = vmatprep.subr.mxu0 0.0
    %v864 = vand.u32 %v554, 4294901760
    %865 = vmatpush1.msra.mxu0 %v864
    %866 = vmatprep.subr.mxu0 0.0
    %v867 = vand.u32 %v555, 4294901760
    %868 = vmatpush1.msra.mxu0 %v867
    %869 = vmatprep.subr.mxu0 0.0
    %v870 = vand.u32 %v556, 4294901760
    %871 = vmatpush1.msra.mxu0 %v870
    %872 = vmatprep.subr.mxu0 0.0
    %v873 = vand.u32 %v557, 4294901760
    %874 = vmatpush1.msra.mxu0 %v873
    %875 = vmatprep.subr.mxu0 0.0
    %876 = vmatpush1.msra.mxu0 0.0
    %877 = vmatprep.subr.mxu0 0.0
    %878 = vmatpush1.msra.mxu0 0.0
    %879 = vmatprep.subr.mxu0 0.0
    %880 = vmatpush1.msra.mxu0 0.0
    %881 = vmatprep.subr.mxu0 0.0
    %882 = vmatpush1.msra.mxu0 0.0
    %883 = vmatprep.subr.mxu0 0.0
    %884 = vmatpush1.msra.mxu0 0.0
    %885 = vmatprep.subr.mxu0 0.0
    %886 = vmatpush1.msra.mxu0 0.0
    %887 = vmatprep.subr.mxu0 0.0
    %888 = vmatpush1.msra.mxu0 0.0
    %889 = vmatprep.subr.mxu0 0.0
    %890 = vmatpush1.msra.mxu0 0.0
    %891 = vmatprep.subr.mxu0 0.0
    %892 = vmatpush1.msra.mxu0 0.0
    %893 = vmatprep.subr.mxu0 0.0
    %894 = vmatpush1.msra.mxu0 0.0
    %895 = vmatprep.subr.mxu0 0.0
    %896 = vmatpush1.msra.mxu0 0.0
    %897 = vmatprep.subr.mxu0 0.0
    %898 = vmatpush1.msra.mxu0 0.0
    %899 = vmatprep.subr.mxu0 0.0
    %900 = vmatpush1.msra.mxu0 0.0
    %901 = vmatprep.subr.mxu0 0.0
    %902 = vmatpush1.msra.mxu0 0.0
    %903 = vmatprep.subr.mxu0 0.0
    %904 = vmatpush1.msra.mxu0 0.0
    %905 = vmatprep.subr.mxu0 0.0
    %906 = vmatpush1.msra.mxu0 0.0
    %907 = vmatprep.subr.mxu0 0.0
    %908 = vmatpush1.msra.mxu0 0.0
    %909 = vmatprep.subr.mxu0 0.0
    %910 = vmatpush1.msra.mxu0 0.0
    %911 = vmatprep.subr.mxu0 0.0
    %912 = vmatpush1.msra.mxu0 0.0
    %913 = vmatprep.subr.mxu0 0.0
    %914 = vmatpush1.msra.mxu0 0.0
    %915 = vmatprep.subr.mxu0 0.0
    %916 = vmatpush1.msra.mxu0 0.0
    %917 = vmatprep.subr.mxu0 0.0
    %918 = vmatpush1.msra.mxu0 0.0
    %919 = vmatprep.subr.mxu0 0.0
    %920 = vmatpush1.msra.mxu0 0.0
    %921 = vmatprep.subr.mxu0 0.0
    %922 = vmatpush1.msra.mxu0 0.0
    %923 = vmatprep.mubr.f32.mxu0 0.0
    %v924 = vand.u32 %v567, 4294901760
    %v925 = vsub.f32 %v567, %v924
    %v926 = vand.u32 %v925, 4294901760
    %927 = vmatmul.mubr.f32.gmra.mrb[0].mxu0 %v926
    %v928 = vpop.f32.mrb[0].mxu0
    %v929 = vadd.f32 %v848, %v928
    %v930 = vpop.f32.mrb[0].mxu0
    %931 = vdwg.mxu0
    %932 = vmatprep.subr.mxu0 0.0
    %v933 = vand.u32 %v550, 4294901760
    %v934 = vsub.f32 %v550, %v933
    %v935 = vand.u32 %v934, 4294901760
    %936 = vmatpush1.msra.mxu0 %v935
    %937 = vmatprep.subr.mxu0 0.0
    %v938 = vand.u32 %v551, 4294901760
    %v939 = vsub.f32 %v551, %v938
    %v940 = vand.u32 %v939, 4294901760
    %941 = vmatpush1.msra.mxu0 %v940
    %942 = vmatprep.subr.mxu0 0.0
    %v943 = vand.u32 %v552, 4294901760
    %v944 = vsub.f32 %v552, %v943
    %v945 = vand.u32 %v944, 4294901760
    %946 = vmatpush1.msra.mxu0 %v945
    %947 = vmatprep.subr.mxu0 0.0
    %v948 = vand.u32 %v553, 4294901760
    %v949 = vsub.f32 %v553, %v948
    %v950 = vand.u32 %v949, 4294901760
    %951 = vmatpush1.msra.mxu0 %v950
    %952 = vmatprep.subr.mxu0 0.0
    %v953 = vand.u32 %v554, 4294901760
    %v954 = vsub.f32 %v554, %v953
    %v955 = vand.u32 %v954, 4294901760
    %956 = vmatpush1.msra.mxu0 %v955
    %957 = vmatprep.subr.mxu0 0.0
    %v958 = vand.u32 %v555, 4294901760
    %v959 = vsub.f32 %v555, %v958
    %v960 = vand.u32 %v959, 4294901760
    %961 = vmatpush1.msra.mxu0 %v960
    %962 = vmatprep.subr.mxu0 0.0
    %v963 = vand.u32 %v556, 4294901760
    %v964 = vsub.f32 %v556, %v963
    %v965 = vand.u32 %v964, 4294901760
    %966 = vmatpush1.msra.mxu0 %v965
    %967 = vmatprep.subr.mxu0 0.0
    %v968 = vand.u32 %v557, 4294901760
    %v969 = vsub.f32 %v557, %v968
    %v970 = vand.u32 %v969, 4294901760
    %971 = vmatpush1.msra.mxu0 %v970
    %972 = vmatprep.subr.mxu0 0.0
    %973 = vmatpush1.msra.mxu0 0.0
    %974 = vmatprep.subr.mxu0 0.0
    %975 = vmatpush1.msra.mxu0 0.0
    %976 = vmatprep.subr.mxu0 0.0
    %977 = vmatpush1.msra.mxu0 0.0
    %978 = vmatprep.subr.mxu0 0.0
    %979 = vmatpush1.msra.mxu0 0.0
    %980 = vmatprep.subr.mxu0 0.0
    %981 = vmatpush1.msra.mxu0 0.0
    %982 = vmatprep.subr.mxu0 0.0
    %983 = vmatpush1.msra.mxu0 0.0
    %984 = vmatprep.subr.mxu0 0.0
    %985 = vmatpush1.msra.mxu0 0.0
    %986 = vmatprep.subr.mxu0 0.0
    %987 = vmatpush1.msra.mxu0 0.0
    %988 = vmatprep.subr.mxu0 0.0
    %989 = vmatpush1.msra.mxu0 0.0
    %990 = vmatprep.subr.mxu0 0.0
    %991 = vmatpush1.msra.mxu0 0.0
    %992 = vmatprep.subr.mxu0 0.0
    %993 = vmatpush1.msra.mxu0 0.0
    %994 = vmatprep.subr.mxu0 0.0
    %995 = vmatpush1.msra.mxu0 0.0
    %996 = vmatprep.subr.mxu0 0.0
    %997 = vmatpush1.msra.mxu0 0.0
    %998 = vmatprep.subr.mxu0 0.0
    %999 = vmatpush1.msra.mxu0 0.0
    %1000 = vmatprep.subr.mxu0 0.0
    %1001 = vmatpush1.msra.mxu0 0.0
    %1002 = vmatprep.subr.mxu0 0.0
    %1003 = vmatpush1.msra.mxu0 0.0
    %1004 = vmatprep.subr.mxu0 0.0
    %1005 = vmatpush1.msra.mxu0 0.0
    %1006 = vmatprep.subr.mxu0 0.0
    %1007 = vmatpush1.msra.mxu0 0.0
    %1008 = vmatprep.subr.mxu0 0.0
    %1009 = vmatpush1.msra.mxu0 0.0
    %1010 = vmatprep.subr.mxu0 0.0
    %1011 = vmatpush1.msra.mxu0 0.0
    %1012 = vmatprep.subr.mxu0 0.0
    %1013 = vmatpush1.msra.mxu0 0.0
    %1014 = vmatprep.subr.mxu0 0.0
    %1015 = vmatpush1.msra.mxu0 0.0
    %1016 = vmatprep.subr.mxu0 0.0
    %1017 = vmatpush1.msra.mxu0 0.0
    %1018 = vmatprep.subr.mxu0 0.0
    %1019 = vmatpush1.msra.mxu0 0.0
    %1020 = vmatprep.mubr.f32.mxu0 0.0
    %v1021 = vand.u32 %v567, 4294901760
    %1022 = vmatmul.mubr.f32.gmra.mrb[0].mxu0 %v1021
    %v1023 = vpop.f32.mrb[0].mxu0
    %v1024 = vadd.f32 %v929, %v1023
    %v1025 = vpop.f32.mrb[0].mxu0
    %1026 = vdwg.mxu0
    %1027 = vmatprep.subr.mxu0 0.0
    %v1028 = vand.u32 %v550, 4294901760
    %1029 = vmatpush1.msra.mxu0 %v1028
    %1030 = vmatprep.subr.mxu0 0.0
    %v1031 = vand.u32 %v551, 4294901760
    %1032 = vmatpush1.msra.mxu0 %v1031
    %1033 = vmatprep.subr.mxu0 0.0
    %v1034 = vand.u32 %v552, 4294901760
    %1035 = vmatpush1.msra.mxu0 %v1034
    %1036 = vmatprep.subr.mxu0 0.0
    %v1037 = vand.u32 %v553, 4294901760
    %1038 = vmatpush1.msra.mxu0 %v1037
    %1039 = vmatprep.subr.mxu0 0.0
    %v1040 = vand.u32 %v554, 4294901760
    %1041 = vmatpush1.msra.mxu0 %v1040
    %1042 = vmatprep.subr.mxu0 0.0
    %v1043 = vand.u32 %v555, 4294901760
    %1044 = vmatpush1.msra.mxu0 %v1043
    %1045 = vmatprep.subr.mxu0 0.0
    %v1046 = vand.u32 %v556, 4294901760
    %1047 = vmatpush1.msra.mxu0 %v1046
    %1048 = vmatprep.subr.mxu0 0.0
    %v1049 = vand.u32 %v557, 4294901760
    %1050 = vmatpush1.msra.mxu0 %v1049
    %1051 = vmatprep.subr.mxu0 0.0
    %1052 = vmatpush1.msra.mxu0 0.0
    %1053 = vmatprep.subr.mxu0 0.0
    %1054 = vmatpush1.msra.mxu0 0.0
    %1055 = vmatprep.subr.mxu0 0.0
    %1056 = vmatpush1.msra.mxu0 0.0
    %1057 = vmatprep.subr.mxu0 0.0
    %1058 = vmatpush1.msra.mxu0 0.0
    %1059 = vmatprep.subr.mxu0 0.0
    %1060 = vmatpush1.msra.mxu0 0.0
    %1061 = vmatprep.subr.mxu0 0.0
    %1062 = vmatpush1.msra.mxu0 0.0
    %1063 = vmatprep.subr.mxu0 0.0
    %1064 = vmatpush1.msra.mxu0 0.0
    %1065 = vmatprep.subr.mxu0 0.0
    %1066 = vmatpush1.msra.mxu0 0.0
    %1067 = vmatprep.subr.mxu0 0.0
    %1068 = vmatpush1.msra.mxu0 0.0
    %1069 = vmatprep.subr.mxu0 0.0
    %1070 = vmatpush1.msra.mxu0 0.0
    %1071 = vmatprep.subr.mxu0 0.0
    %1072 = vmatpush1.msra.mxu0 0.0
    %1073 = vmatprep.subr.mxu0 0.0
    %1074 = vmatpush1.msra.mxu0 0.0
    %1075 = vmatprep.subr.mxu0 0.0
    %1076 = vmatpush1.msra.mxu0 0.0
    %1077 = vmatprep.subr.mxu0 0.0
    %1078 = vmatpush1.msra.mxu0 0.0
    %1079 = vmatprep.subr.mxu0 0.0
    %1080 = vmatpush1.msra.mxu0 0.0
    %1081 = vmatprep.subr.mxu0 0.0
    %1082 = vmatpush1.msra.mxu0 0.0
    %1083 = vmatprep.subr.mxu0 0.0
    %1084 = vmatpush1.msra.mxu0 0.0
    %1085 = vmatprep.subr.mxu0 0.0
    %1086 = vmatpush1.msra.mxu0 0.0
    %1087 = vmatprep.subr.mxu0 0.0
    %1088 = vmatpush1.msra.mxu0 0.0
    %1089 = vmatprep.subr.mxu0 0.0
    %1090 = vmatpush1.msra.mxu0 0.0
    %1091 = vmatprep.subr.mxu0 0.0
    %1092 = vmatpush1.msra.mxu0 0.0
    %1093 = vmatprep.subr.mxu0 0.0
    %1094 = vmatpush1.msra.mxu0 0.0
    %1095 = vmatprep.subr.mxu0 0.0
    %1096 = vmatpush1.msra.mxu0 0.0
    %1097 = vmatprep.subr.mxu0 0.0
    %1098 = vmatpush1.msra.mxu0 0.0
    %1099 = vmatprep.mubr.f32.mxu0 0.0
    %v1100 = vand.u32 %v567, 4294901760
    %1101 = vmatmul.mubr.f32.gmra.mrb[0].mxu0 %v1100
    %v1102 = vpop.f32.mrb[0].mxu0
    %v1103 = vadd.f32 %v1024, %v1102
    %v1104 = vpop.f32.mrb[0].mxu0
    %1105 = vdwg.mxu0
    %vm1106 = vcmask 130048
    %1107 = vst.msk [vmem:[#allocation5] sm:$0xff] %vm1106, %v1103
    // Predicated region
    $region30: #{encoder_forward_prepared.1} parent=1 // pred_check
      _
    $region31: #{encoder_forward_prepared.1} parent=1 // pred_check_branch
      %1109 = sbr.rel (0) target = $region33
    $region32: #{encoder_forward_prepared.1} parent=1 // pred_region
      %s1111 = ssub.s32 128, 128
      %1112 = vsyncadd [#allocation3], %s1111
      %s1114 = sshll.u32 [#allocation5], 4
      %s1115 = int_to_ptr.vmem [resolvable:$true] %s1114
      %1117 = dma.vmem_to_hbm [thread:$0]  %s1115, 128, %s6, [#allocation3]
    $region33: #{encoder_forward_prepared.1} parent=1 // pred_fallthru
      _
    // Predicated region
    $region34: #{encoder_forward_prepared.1} parent=1 // pred_check
      _
    $region35: #{encoder_forward_prepared.1} parent=1 // pred_check_branch
      %1119 = sbr.rel (0) target = $region37
    $region36: #{encoder_forward_prepared.1} parent=1 // pred_region
      %1120 = dma.done [#allocation3], 128
    $region37: #{encoder_forward_prepared.1} parent=1 // pred_fallthru
      _
    %1121 = vsyncpa [#allocation3], 1
    %1122 = vsyncpa [#allocation4], 1

</llo_original>
